<compile_context>
chip_gen: v7x
topology: tpu7x:2x2x1
jax: 0.10.0
libtpu: 0.0.40
codegen_flags: <defaults>
</compile_context>

<pallas_src>
import functools

import jax
import jax.numpy as jnp
from jax.experimental import pallas as pl
from jax.experimental.pallas import tpu as pltpu


def _round_up(n, m):
    return (n + m - 1) // m * m


def _is_pow2(n):
    return n > 0 and (n & (n - 1)) == 0


def _group_butterfly(v, combine, group, width):
    """Combine values within aligned, power-of-two-sized lane groups.

    After log2(group) steps every lane holds the combine-reduction of its group.
    Uses XLU rolls (otherwise idle here) plus one VPU select/combine per step.
    """
    lane = jax.lax.broadcasted_iota(jnp.int32, v.shape, 1)
    s = 1
    while s < group:
        # np.roll semantics: roll(x, k)[j] == x[(j - k) % width]
        from_hi = pltpu.roll(v, shift=width - s, axis=1)   # value of lane j + s
        from_lo = pltpu.roll(v, shift=s, axis=1)           # value of lane j - s
        partner = jnp.where((lane & s) == 0, from_hi, from_lo)  # lane j ^ s
        v = combine(v, partner)
        s *= 2
    return v


def _catnet_kernel(*refs, num_atoms, out_dim_p, use_roll):
    if use_roll:
        (x_ref, w1_ref, b1_ref, w2_ref, b2_ref, w3_ref, b3_ref, out_ref) = refs
        gsum_ref = None
    else:
        (x_ref, w1_ref, b1_ref, w2_ref, b2_ref, w3_ref, b3_ref, gsum_ref,
         out_ref) = refs

    # fc1 / fc2 / fc3 on the MXU: narrow operands, f32 accumulation,
    # f32 elementwise epilogues.
    h1 = jnp.dot(x_ref[...], w1_ref[...],
                 preferred_element_type=jnp.float32) + b1_ref[...]
    h1 = jnp.maximum(h1, 0.0).astype(w2_ref.dtype)
    h2 = jnp.dot(h1, w2_ref[...],
                 preferred_element_type=jnp.float32) + b2_ref[...]
    h2 = jnp.maximum(h2, 0.0).astype(w3_ref.dtype)
    logits = jnp.dot(h2, w3_ref[...],
                     preferred_element_type=jnp.float32) + b3_ref[...]

    if use_roll:
        # Exact per-group max and per-group sum via XLU roll butterflies.
        m = _group_butterfly(logits, jnp.maximum, num_atoms, out_dim_p)
        e = jnp.exp(logits - m)
        denom = _group_butterfly(e, jnp.add, num_atoms, out_dim_p)
    else:
        # Row-wide max is constant within every group -> exact stabilizer.
        m = jnp.max(logits, axis=-1, keepdims=True)
        e = jnp.exp(logits - m)
        # Block-diagonal ones matrix: denom[:, j] = sum_{i in group(j)} e[:, i].
        denom = jnp.dot(e, gsum_ref[...], preferred_element_type=jnp.float32)

    # Guard: a fully-underflowed group must not produce inf/NaN downstream.
    denom = jnp.maximum(denom, jnp.finfo(jnp.float32).tiny)

    # EUP approx reciprocal + one Newton refinement (~1e-7 relative error).
    r = pl.reciprocal(denom, approx=True)
    r = r * (2.0 - denom * r)

    out_ref[...] = e * r          # one lane-dense (TB, out_dim_p) store


def categorical_network(x, params, *, action_dim, num_atoms,
                        block_batch=1024, min_grid_steps=2,
                        matmul_dtype=jnp.bfloat16):
    """Full CategoricalNetwork forward pass as a single batch-tiled pallas_call."""
    w1, b1, w2, b2, w3, b3 = params
    batch, state_dim = x.shape
    out_dim = action_dim * num_atoms
    out_dim_p = _round_up(out_dim, 128)        # lane-dense output stores

    # --- batch tile ----------------------------------------------------------
    align = 16 if jnp.dtype(matmul_dtype).itemsize < 4 else 8
    rows = _round_up(batch, align)
    # Cap the tile so the grid has >= min_grid_steps whenever the batch allows
    # it (v7x megacore sharding); never below one sublane tile.
    tb = min(_round_up(block_batch, align),
             _round_up(-(-rows // min_grid_steps), align))
    tb = max(tb, align)
    padded = _round_up(batch, tb)
    if padded != batch:
        x = jnp.pad(x, ((0, padded - batch), (0, 0)))   # zero rows stay finite

    # --- operand casts / output padding --------------------------------------
    xm = x.astype(matmul_dtype)
    w1m, w2m, w3m = (w.astype(matmul_dtype) for w in (w1, w2, w3))
    b1f, b2f, b3f = (b.astype(jnp.float32) for b in (b1, b2, b3))
    if out_dim_p != out_dim:
        w3m = jnp.pad(w3m, ((0, 0), (0, out_dim_p - out_dim)))
        b3f = jnp.pad(b3f, ((0, 0), (0, out_dim_p - out_dim)))

    use_roll = _is_pow2(num_atoms)

    def resident(arr):
        n = arr.ndim
        return pl.BlockSpec(arr.shape, lambda i: (0,) * n)

    inputs = [xm, w1m, b1f, w2m, b2f, w3m, b3f]
    in_specs = [pl.BlockSpec((tb, state_dim), lambda i: (i, 0))]
    in_specs += [resident(a) for a in inputs[1:]]

    if not use_roll:
        # Block-diagonal ones matrix; pad lanes get their own identity group.
        lane_idx = jnp.arange(out_dim_p)
        gid = jnp.where(lane_idx < out_dim, lane_idx // num_atoms,
                        lane_idx + out_dim)
        gsum = (gid[:, None] == gid[None, :]).astype(jnp.float32)
        inputs.append(gsum)
        in_specs.append(resident(gsum))

    kernel = functools.partial(_catnet_kernel, num_atoms=num_atoms,
                               out_dim_p=out_dim_p, use_roll=use_roll)

    probs_flat = pl.pallas_call(
        kernel,
        out_shape=jax.ShapeDtypeStruct((padded, out_dim_p), jnp.float32),
        grid=(padded // tb,),
        in_specs=in_specs,
        out_specs=pl.BlockSpec((tb, out_dim_p), lambda i: (i, 0)),
        compiler_params=pltpu.CompilerParams(
            dimension_semantics=("parallel",),
            vmem_limit_bytes=32 * 1024 * 1024),
    )(*inputs)

    probs_flat = probs_flat[:batch, :out_dim]
    # glue for the PyTorch .view(-1, action_dim, num_atoms)
    return probs_flat.reshape(batch, action_dim, num_atoms)


def init_params(key, state_dim, action_dim, num_atoms):
    """PyTorch-style uniform(-1/sqrt(fan_in), 1/sqrt(fan_in)) init."""
    sizes = [(state_dim, 64), (64, 64), (64, action_dim * num_atoms)]
    params = []
    for (fan_in, fan_out) in sizes:
        key, kw, kb = jax.random.split(key, 3)
        bound = 1.0 / jnp.sqrt(fan_in)
        w = jax.random.uniform(kw, (fan_in, fan_out), jnp.float32, -bound, bound)
        b = jax.random.uniform(kb, (1, fan_out), jnp.float32, -bound, bound)
        params += [w, b]
    return tuple(params)


def _reference(x, params, action_dim, num_atoms):
    w1, b1, w2, b2, w3, b3 = params
    h1 = jax.nn.relu(x @ w1 + b1)
    h2 = jax.nn.relu(h1 @ w2 + b2)
    logits = (h2 @ w3 + b3).reshape(-1, action_dim, num_atoms)
    return jax.nn.softmax(logits, axis=-1)


if __name__ == "__main__":
    # Config 1: power-of-two atoms -> XLU roll-butterfly softmax path.
    batch, state_dim, action_dim, num_atoms = 8, 16, 4, 32
    key = jax.random.PRNGKey(0)
    key, kx = jax.random.split(key)
    x = jax.random.normal(kx, (batch, state_dim), jnp.float32)
    params = init_params(key, state_dim, action_dim, num_atoms)
    ref = _reference(x, params, action_dim, num_atoms)

    # f32 operands: tight check against the pure-JAX reference.
    out_f32 = categorical_network(x, params, action_dim=action_dim,
                                  num_atoms=num_atoms,
                                  matmul_dtype=jnp.float32)
    out_f32 = jax.block_until_ready(out_f32)
    assert out_f32.shape == (batch, action_dim, num_atoms)
    assert jnp.allclose(out_f32, ref, atol=1e-5, rtol=1e-5)

    # bf16 matmul operands (default fast path on v5e/v6e/v7x MXUs).
    out_bf16 = categorical_network(x, params, action_dim=action_dim,
                                   num_atoms=num_atoms)
    out_bf16 = jax.block_until_ready(out_bf16)
    assert jnp.allclose(out_bf16, ref, atol=3e-2, rtol=3e-2)
    assert jnp.allclose(out_bf16.sum(-1), 1.0, atol=1e-3)

    # Config 2: non-power-of-two atoms (real C51: 51 atoms) -> padded lane-dense
    # output + block-diagonal MXU denominator path; also exercises batch padding
    # and a multi-step grid.
    b2_, s2_, a2_, n2_ = 37, 10, 3, 51
    key, kx2 = jax.random.split(key)
    x2 = jax.random.normal(kx2, (b2_, s2_), jnp.float32)
    params2 = init_params(key, s2_, a2_, n2_)
    out2 = categorical_network(x2, params2, action_dim=a2_, num_atoms=n2_,
                               matmul_dtype=jnp.float32)
    out2 = jax.block_until_ready(out2)
    ref2 = _reference(x2, params2, a2_, n2_)
    assert out2.shape == (b2_, a2_, n2_)
    assert jnp.allclose(out2, ref2, atol=1e-5, rtol=1e-5)

    print("KERNEL_OK")
</pallas_src>

<mosaic_0001>
module attributes {stable_mosaic.version = 11 : i64} {
  func.func @_catnet_kernel(%arg0: i32, %arg1: memref<8x16xf32, #tpu.memory_space<vmem>>, %arg2: memref<16x64xf32, #tpu.memory_space<vmem>>, %arg3: memref<1x64xf32, #tpu.memory_space<vmem>>, %arg4: memref<64x64xf32, #tpu.memory_space<vmem>>, %arg5: memref<1x64xf32, #tpu.memory_space<vmem>>, %arg6: memref<64x128xf32, #tpu.memory_space<vmem>>, %arg7: memref<1x128xf32, #tpu.memory_space<vmem>>, %arg8: memref<8x128xf32, #tpu.memory_space<vmem>>) attributes {dimension_semantics = [#tpu.dimension_semantics<parallel>], iteration_bounds = array<i64: 1>, scalar_prefetch = 0 : i64, scratch_operands = 0 : i64, tpu.core_type = #tpu.core_type<tc>, window_params = [{transform_indices = @transform_0, window_bounds = array<i64: 8, 16>}, {pipeline_mode = #tpu.pipeline_mode<synchronous>, transform_indices = @transform_1, window_bounds = array<i64: 16, 64>}, {pipeline_mode = #tpu.pipeline_mode<synchronous>, transform_indices = @transform_2, window_bounds = array<i64: 1, 64>}, {pipeline_mode = #tpu.pipeline_mode<synchronous>, transform_indices = @transform_3, window_bounds = array<i64: 64, 64>}, {pipeline_mode = #tpu.pipeline_mode<synchronous>, transform_indices = @transform_4, window_bounds = array<i64: 1, 64>}, {pipeline_mode = #tpu.pipeline_mode<synchronous>, transform_indices = @transform_5, window_bounds = array<i64: 64, 128>}, {pipeline_mode = #tpu.pipeline_mode<synchronous>, transform_indices = @transform_6, window_bounds = array<i64: 1, 128>}, {transform_indices = @transform_7, window_bounds = array<i64: 8, 128>}]} {
    %c0 = arith.constant 0 : index
    %c0_0 = arith.constant 0 : index
    %0 = vector.load %arg1[%c0, %c0_0] : memref<8x16xf32, #tpu.memory_space<vmem>>, vector<8x16xf32>
    %c0_1 = arith.constant 0 : index
    %c0_2 = arith.constant 0 : index
    %1 = vector.load %arg2[%c0_1, %c0_2] : memref<16x64xf32, #tpu.memory_space<vmem>>, vector<16x64xf32>
    %cst = arith.constant dense<0.000000e+00> : vector<8x64xf32>
    %2 = tpu.matmul %0, %1, %cst {dimension_numbers = #tpu.dot_dimension_numbers<[1], [0], [0], [1], [0, 0, 1, 1], [], []>} : vector<8x16xf32>, vector<16x64xf32>, vector<8x64xf32> -> vector<8x64xf32>
    %c0_3 = arith.constant 0 : index
    %c0_4 = arith.constant 0 : index
    %3 = vector.load %arg3[%c0_3, %c0_4] : memref<1x64xf32, #tpu.memory_space<vmem>>, vector<1x64xf32>
    %4 = vector.broadcast %3 : vector<1x64xf32> to vector<8x64xf32>
    %5 = arith.addf %2, %4 : vector<8x64xf32>
    %cst_5 = arith.constant 0.000000e+00 : f32
    %6 = vector.broadcast %cst_5 : f32 to vector<8x64xf32>
    %7 = arith.maximumf %5, %6 : vector<8x64xf32>
    %c0_6 = arith.constant 0 : index
    %c0_7 = arith.constant 0 : index
    %8 = vector.load %arg4[%c0_6, %c0_7] : memref<64x64xf32, #tpu.memory_space<vmem>>, vector<64x64xf32>
    %cst_8 = arith.constant dense<0.000000e+00> : vector<8x64xf32>
    %9 = tpu.matmul %7, %8, %cst_8 {dimension_numbers = #tpu.dot_dimension_numbers<[1], [0], [0], [1], [0, 0, 1, 1], [], []>} : vector<8x64xf32>, vector<64x64xf32>, vector<8x64xf32> -> vector<8x64xf32>
    %c0_9 = arith.constant 0 : index
    %c0_10 = arith.constant 0 : index
    %10 = vector.load %arg5[%c0_9, %c0_10] : memref<1x64xf32, #tpu.memory_space<vmem>>, vector<1x64xf32>
    %11 = vector.broadcast %10 : vector<1x64xf32> to vector<8x64xf32>
    %12 = arith.addf %9, %11 : vector<8x64xf32>
    %cst_11 = arith.constant 0.000000e+00 : f32
    %13 = vector.broadcast %cst_11 : f32 to vector<8x64xf32>
    %14 = arith.maximumf %12, %13 : vector<8x64xf32>
    %c0_12 = arith.constant 0 : index
    %c0_13 = arith.constant 0 : index
    %15 = vector.load %arg6[%c0_12, %c0_13] : memref<64x128xf32, #tpu.memory_space<vmem>>, vector<64x128xf32>
    %cst_14 = arith.constant dense<0.000000e+00> : vector<8x128xf32>
    %16 = tpu.matmul %14, %15, %cst_14 {dimension_numbers = #tpu.dot_dimension_numbers<[1], [0], [0], [1], [0, 0, 1, 1], [], []>} : vector<8x64xf32>, vector<64x128xf32>, vector<8x128xf32> -> vector<8x128xf32>
    %c0_15 = arith.constant 0 : index
    %c0_16 = arith.constant 0 : index
    %17 = vector.load %arg7[%c0_15, %c0_16] : memref<1x128xf32, #tpu.memory_space<vmem>>, vector<1x128xf32>
    %18 = vector.broadcast %17 : vector<1x128xf32> to vector<8x128xf32>
    %19 = arith.addf %16, %18 : vector<8x128xf32>
    %20 = tpu.iota {dimensions = array<i32: 1>} : vector<8x128xi32>
    %c127_i32 = arith.constant 127 : i32
    %21 = tpu.dynamic_rotate %19 by %c127_i32 dim 1 : vector<8x128xf32>, i32 -> vector<8x128xf32>
    %c1_i32 = arith.constant 1 : i32
    %22 = tpu.dynamic_rotate %19 by %c1_i32 dim 1 : vector<8x128xf32>, i32 -> vector<8x128xf32>
    %c1_i32_17 = arith.constant 1 : i32
    %23 = vector.broadcast %c1_i32_17 : i32 to vector<8x128xi32>
    %24 = arith.andi %20, %23 : vector<8x128xi32>
    %c0_i32 = arith.constant 0 : i32
    %25 = vector.broadcast %c0_i32 : i32 to vector<8x128xi32>
    %26 = arith.cmpi eq, %24, %25 : vector<8x128xi32>
    %27 = arith.select %26, %21, %22 : vector<8x128xi1>, vector<8x128xf32>
    %28 = arith.maximumf %19, %27 : vector<8x128xf32>
    %c126_i32 = arith.constant 126 : i32
    %29 = tpu.dynamic_rotate %28 by %c126_i32 dim 1 : vector<8x128xf32>, i32 -> vector<8x128xf32>
    %c2_i32 = arith.constant 2 : i32
    %30 = tpu.dynamic_rotate %28 by %c2_i32 dim 1 : vector<8x128xf32>, i32 -> vector<8x128xf32>
    %c2_i32_18 = arith.constant 2 : i32
    %31 = vector.broadcast %c2_i32_18 : i32 to vector<8x128xi32>
    %32 = arith.andi %20, %31 : vector<8x128xi32>
    %c0_i32_19 = arith.constant 0 : i32
    %33 = vector.broadcast %c0_i32_19 : i32 to vector<8x128xi32>
    %34 = arith.cmpi eq, %32, %33 : vector<8x128xi32>
    %35 = arith.select %34, %29, %30 : vector<8x128xi1>, vector<8x128xf32>
    %36 = arith.maximumf %28, %35 : vector<8x128xf32>
    %c124_i32 = arith.constant 124 : i32
    %37 = tpu.dynamic_rotate %36 by %c124_i32 dim 1 : vector<8x128xf32>, i32 -> vector<8x128xf32>
    %c4_i32 = arith.constant 4 : i32
    %38 = tpu.dynamic_rotate %36 by %c4_i32 dim 1 : vector<8x128xf32>, i32 -> vector<8x128xf32>
    %c4_i32_20 = arith.constant 4 : i32
    %39 = vector.broadcast %c4_i32_20 : i32 to vector<8x128xi32>
    %40 = arith.andi %20, %39 : vector<8x128xi32>
    %c0_i32_21 = arith.constant 0 : i32
    %41 = vector.broadcast %c0_i32_21 : i32 to vector<8x128xi32>
    %42 = arith.cmpi eq, %40, %41 : vector<8x128xi32>
    %43 = arith.select %42, %37, %38 : vector<8x128xi1>, vector<8x128xf32>
    %44 = arith.maximumf %36, %43 : vector<8x128xf32>
    %c120_i32 = arith.constant 120 : i32
    %45 = tpu.dynamic_rotate %44 by %c120_i32 dim 1 : vector<8x128xf32>, i32 -> vector<8x128xf32>
    %c8_i32 = arith.constant 8 : i32
    %46 = tpu.dynamic_rotate %44 by %c8_i32 dim 1 : vector<8x128xf32>, i32 -> vector<8x128xf32>
    %c8_i32_22 = arith.constant 8 : i32
    %47 = vector.broadcast %c8_i32_22 : i32 to vector<8x128xi32>
    %48 = arith.andi %20, %47 : vector<8x128xi32>
    %c0_i32_23 = arith.constant 0 : i32
    %49 = vector.broadcast %c0_i32_23 : i32 to vector<8x128xi32>
    %50 = arith.cmpi eq, %48, %49 : vector<8x128xi32>
    %51 = arith.select %50, %45, %46 : vector<8x128xi1>, vector<8x128xf32>
    %52 = arith.maximumf %44, %51 : vector<8x128xf32>
    %c112_i32 = arith.constant 112 : i32
    %53 = tpu.dynamic_rotate %52 by %c112_i32 dim 1 : vector<8x128xf32>, i32 -> vector<8x128xf32>
    %c16_i32 = arith.constant 16 : i32
    %54 = tpu.dynamic_rotate %52 by %c16_i32 dim 1 : vector<8x128xf32>, i32 -> vector<8x128xf32>
    %c16_i32_24 = arith.constant 16 : i32
    %55 = vector.broadcast %c16_i32_24 : i32 to vector<8x128xi32>
    %56 = arith.andi %20, %55 : vector<8x128xi32>
    %c0_i32_25 = arith.constant 0 : i32
    %57 = vector.broadcast %c0_i32_25 : i32 to vector<8x128xi32>
    %58 = arith.cmpi eq, %56, %57 : vector<8x128xi32>
    %59 = arith.select %58, %53, %54 : vector<8x128xi1>, vector<8x128xf32>
    %60 = arith.maximumf %52, %59 : vector<8x128xf32>
    %61 = arith.subf %19, %60 : vector<8x128xf32>
    %62 = math.exp %61 : vector<8x128xf32>
    %63 = tpu.iota {dimensions = array<i32: 1>} : vector<8x128xi32>
    %c127_i32_26 = arith.constant 127 : i32
    %64 = tpu.dynamic_rotate %62 by %c127_i32_26 dim 1 : vector<8x128xf32>, i32 -> vector<8x128xf32>
    %c1_i32_27 = arith.constant 1 : i32
    %65 = tpu.dynamic_rotate %62 by %c1_i32_27 dim 1 : vector<8x128xf32>, i32 -> vector<8x128xf32>
    %c1_i32_28 = arith.constant 1 : i32
    %66 = vector.broadcast %c1_i32_28 : i32 to vector<8x128xi32>
    %67 = arith.andi %63, %66 : vector<8x128xi32>
    %c0_i32_29 = arith.constant 0 : i32
    %68 = vector.broadcast %c0_i32_29 : i32 to vector<8x128xi32>
    %69 = arith.cmpi eq, %67, %68 : vector<8x128xi32>
    %70 = arith.select %69, %64, %65 : vector<8x128xi1>, vector<8x128xf32>
    %71 = arith.addf %62, %70 : vector<8x128xf32>
    %c126_i32_30 = arith.constant 126 : i32
    %72 = tpu.dynamic_rotate %71 by %c126_i32_30 dim 1 : vector<8x128xf32>, i32 -> vector<8x128xf32>
    %c2_i32_31 = arith.constant 2 : i32
    %73 = tpu.dynamic_rotate %71 by %c2_i32_31 dim 1 : vector<8x128xf32>, i32 -> vector<8x128xf32>
    %c2_i32_32 = arith.constant 2 : i32
    %74 = vector.broadcast %c2_i32_32 : i32 to vector<8x128xi32>
    %75 = arith.andi %63, %74 : vector<8x128xi32>
    %c0_i32_33 = arith.constant 0 : i32
    %76 = vector.broadcast %c0_i32_33 : i32 to vector<8x128xi32>
    %77 = arith.cmpi eq, %75, %76 : vector<8x128xi32>
    %78 = arith.select %77, %72, %73 : vector<8x128xi1>, vector<8x128xf32>
    %79 = arith.addf %71, %78 : vector<8x128xf32>
    %c124_i32_34 = arith.constant 124 : i32
    %80 = tpu.dynamic_rotate %79 by %c124_i32_34 dim 1 : vector<8x128xf32>, i32 -> vector<8x128xf32>
    %c4_i32_35 = arith.constant 4 : i32
    %81 = tpu.dynamic_rotate %79 by %c4_i32_35 dim 1 : vector<8x128xf32>, i32 -> vector<8x128xf32>
    %c4_i32_36 = arith.constant 4 : i32
    %82 = vector.broadcast %c4_i32_36 : i32 to vector<8x128xi32>
    %83 = arith.andi %63, %82 : vector<8x128xi32>
    %c0_i32_37 = arith.constant 0 : i32
    %84 = vector.broadcast %c0_i32_37 : i32 to vector<8x128xi32>
    %85 = arith.cmpi eq, %83, %84 : vector<8x128xi32>
    %86 = arith.select %85, %80, %81 : vector<8x128xi1>, vector<8x128xf32>
    %87 = arith.addf %79, %86 : vector<8x128xf32>
    %c120_i32_38 = arith.constant 120 : i32
    %88 = tpu.dynamic_rotate %87 by %c120_i32_38 dim 1 : vector<8x128xf32>, i32 -> vector<8x128xf32>
    %c8_i32_39 = arith.constant 8 : i32
    %89 = tpu.dynamic_rotate %87 by %c8_i32_39 dim 1 : vector<8x128xf32>, i32 -> vector<8x128xf32>
    %c8_i32_40 = arith.constant 8 : i32
    %90 = vector.broadcast %c8_i32_40 : i32 to vector<8x128xi32>
    %91 = arith.andi %63, %90 : vector<8x128xi32>
    %c0_i32_41 = arith.constant 0 : i32
    %92 = vector.broadcast %c0_i32_41 : i32 to vector<8x128xi32>
    %93 = arith.cmpi eq, %91, %92 : vector<8x128xi32>
    %94 = arith.select %93, %88, %89 : vector<8x128xi1>, vector<8x128xf32>
    %95 = arith.addf %87, %94 : vector<8x128xf32>
    %c112_i32_42 = arith.constant 112 : i32
    %96 = tpu.dynamic_rotate %95 by %c112_i32_42 dim 1 : vector<8x128xf32>, i32 -> vector<8x128xf32>
    %c16_i32_43 = arith.constant 16 : i32
    %97 = tpu.dynamic_rotate %95 by %c16_i32_43 dim 1 : vector<8x128xf32>, i32 -> vector<8x128xf32>
    %c16_i32_44 = arith.constant 16 : i32
    %98 = vector.broadcast %c16_i32_44 : i32 to vector<8x128xi32>
    %99 = arith.andi %63, %98 : vector<8x128xi32>
    %c0_i32_45 = arith.constant 0 : i32
    %100 = vector.broadcast %c0_i32_45 : i32 to vector<8x128xi32>
    %101 = arith.cmpi eq, %99, %100 : vector<8x128xi32>
    %102 = arith.select %101, %96, %97 : vector<8x128xi1>, vector<8x128xf32>
    %103 = arith.addf %95, %102 : vector<8x128xf32>
    %cst_46 = arith.constant 1.17549435E-38 : f32
    %104 = vector.broadcast %cst_46 : f32 to vector<8x128xf32>
    %105 = arith.maximumf %103, %104 : vector<8x128xf32>
    %106 = tpu.reciprocal %105 {approx = true} : vector<8x128xf32> -> vector<8x128xf32>
    %107 = arith.mulf %105, %106 : vector<8x128xf32>
    %cst_47 = arith.constant 2.000000e+00 : f32
    %108 = vector.broadcast %cst_47 : f32 to vector<8x128xf32>
    %109 = arith.subf %108, %107 : vector<8x128xf32>
    %110 = arith.mulf %106, %109 : vector<8x128xf32>
    %111 = arith.mulf %62, %110 : vector<8x128xf32>
    %c0_48 = arith.constant 0 : index
    %c0_49 = arith.constant 0 : index
    %112 = vector.load %arg8[%c0_48, %c0_49] : memref<8x128xf32, #tpu.memory_space<vmem>>, vector<8x128xf32>
    tpu.vector_store %arg8[%c0_48, %c0_49], %111 {strides = array<i32>} : memref<8x128xf32, #tpu.memory_space<vmem>>, vector<8x128xf32>,
    return
  }
  func.func @transform_0(%arg0: i32) -> (i32, i32) {
    %c0_i32 = arith.constant 0 : i32
    %c0_i32_0 = arith.constant 0 : i32
    return %arg0, %c0_i32 : i32, i32
  }
  func.func @transform_1(%arg0: i32) -> (i32, i32) {
    %c0_i32 = arith.constant 0 : i32
    %c0_i32_0 = arith.constant 0 : i32
    %c0_i32_1 = arith.constant 0 : i32
    return %c0_i32, %c0_i32_0 : i32, i32
  }
  func.func @transform_2(%arg0: i32) -> (i32, i32) {
    %c0_i32 = arith.constant 0 : i32
    %c0_i32_0 = arith.constant 0 : i32
    %c0_i32_1 = arith.constant 0 : i32
    return %c0_i32, %c0_i32_0 : i32, i32
  }
  func.func @transform_3(%arg0: i32) -> (i32, i32) {
    %c0_i32 = arith.constant 0 : i32
    %c0_i32_0 = arith.constant 0 : i32
    %c0_i32_1 = arith.constant 0 : i32
    return %c0_i32, %c0_i32_0 : i32, i32
  }
  func.func @transform_4(%arg0: i32) -> (i32, i32) {
    %c0_i32 = arith.constant 0 : i32
    %c0_i32_0 = arith.constant 0 : i32
    %c0_i32_1 = arith.constant 0 : i32
    return %c0_i32, %c0_i32_0 : i32, i32
  }
  func.func @transform_5(%arg0: i32) -> (i32, i32) {
    %c0_i32 = arith.constant 0 : i32
    %c0_i32_0 = arith.constant 0 : i32
    %c0_i32_1 = arith.constant 0 : i32
    return %c0_i32, %c0_i32_0 : i32, i32
  }
  func.func @transform_6(%arg0: i32) -> (i32, i32) {
    %c0_i32 = arith.constant 0 : i32
    %c0_i32_0 = arith.constant 0 : i32
    %c0_i32_1 = arith.constant 0 : i32
    return %c0_i32, %c0_i32_0 : i32, i32
  }
  func.func @transform_7(%arg0: i32) -> (i32, i32) {
    %c0_i32 = arith.constant 0 : i32
    %c0_i32_0 = arith.constant 0 : i32
    return %arg0, %c0_i32 : i32, i32
  }
}

</mosaic_0001>

<llo_original>
// kernel: tpu_custom_call.1
$region0: #{tpu_custom_call.1}
  #allocation0 [shape = 'u32[]', space=smem, size = 0x4, offset = 0x4, fixed_abs, tag = 'smem constant byte address 0x4 - core index']
  #allocation1 [shape = 'u32[144,128]{1,0:T(1,128)}', space=vmem, size = 0x12000, scoped, tag = 'internal scratch']
  %s0 = inlined_call_operand.hbm [shape: f32[8,16], index: 0, kind: input, shape index: {}]
  %s1 = inlined_call_operand.hbm [shape: f32[16,64], index: 1, kind: input, shape index: {}]
  %s2 = inlined_call_operand.vmem [shape: f32[1,64], index: 2, kind: input, shape index: {}]
  %s3 = inlined_call_operand.hbm [shape: f32[64,64], index: 3, kind: input, shape index: {}]
  %s4 = inlined_call_operand.vmem [shape: f32[1,64], index: 4, kind: input, shape index: {}]
  %s5 = inlined_call_operand.hbm [shape: f32[64,128], index: 5, kind: input, shape index: {}]
  %s6 = inlined_call_operand.vmem [shape: f32[1,128], index: 6, kind: input, shape index: {}]
  %s7 = inlined_call_operand.hbm [shape: f32[8,128], index: 7, kind: output, shape index: {}]
  %s8 = sld [smem:[#allocation0]]
  $region54: #{tpu_custom_call.1} parent=0
    _
  %s10 = ssub.s32 1, %s8
  %s11 = scalar_select 0, %s10, %s8
  $region1: #{tpu_custom_call.1} parent=0
    #allocation2 [shape = 'u8[4096]{0}', space=vmem, size = 0x1000, scoped, tag = 'input window, operand 0, single buffered']
    #allocation3 [shape = 's32[1]{0}', space=sflag, size = 0x4, scoped, tag = 'scoped memory for tpu_custom_call.1']
    #allocation4 [shape = 's32[1]{0}', space=sflag, size = 0x4, scoped, tag = 'scoped memory for tpu_custom_call.1']
    #allocation5 [shape = 'u8[8192]{0}', space=vmem, size = 0x2000, scoped, tag = 'input window, operand 1, single buffered']
    #allocation6 [shape = 's32[1]{0}', space=sflag, size = 0x4, scoped, tag = 'scoped memory for tpu_custom_call.1']
    #allocation7 [shape = 'u8[32768]{0}', space=vmem, size = 0x8000, scoped, tag = 'input window, operand 3, single buffered']
    #allocation8 [shape = 'u8[32768]{0}', space=vmem, size = 0x8000, scoped, tag = 'input window, operand 5, single buffered']
    #allocation9 [shape = 's32[1]{0}', space=sflag, size = 0x4, scoped, tag = 'scoped memory for tpu_custom_call.1']
    #allocation10 [shape = 'u8[4096]{0}', space=vmem, size = 0x1000, scoped, tag = 'output window, operand 0, single buffered']
    %12 = vsyncpa [#allocation3], 0
    %13 = vsyncpa [#allocation6], 0
    %14 = vsyncpa [#allocation9], 0
    %15 = vsyncpa [#allocation4], 0
    // Predicated region
    $region2: #{tpu_custom_call.1} parent=1 // pred_check
      _
    $region3: #{tpu_custom_call.1} parent=1 // pred_check_branch
      %17 = sbr.rel (0) target = $region5
    $region4: #{tpu_custom_call.1} parent=1 // pred_region
      %s19 = ssub.s32 128, 128
      %20 = vsyncadd [#allocation3], %s19
      %s22 = sshll.u32 [#allocation2], 4
      %s23 = int_to_ptr.vmem [resolvable:$true] %s22
      %25 = dma.hbm_to_vmem [thread:$0]  %s0, 128, %s23, [#allocation3]
    $region5: #{tpu_custom_call.1} parent=1 // pred_fallthru
      _
    // Predicated region
    $region6: #{tpu_custom_call.1} parent=1 // pred_check
      _
    $region7: #{tpu_custom_call.1} parent=1 // pred_check_branch
      %27 = sbr.rel (0) target = $region9
    $region8: #{tpu_custom_call.1} parent=1 // pred_region
      %s29 = ssub.s32 256, 256
      %30 = vsyncadd [#allocation6], %s29
      %s31 = sshll.u32 [#allocation5], 4
      %s32 = int_to_ptr.vmem [resolvable:$true] %s31
      %37 = dma.hbm_to_vmem [thread:$0]  %s1, 256, %s32, [#allocation6], 128, 128, 8
    $region9: #{tpu_custom_call.1} parent=1 // pred_fallthru
      _
    // Predicated region
    $region10: #{tpu_custom_call.1} parent=1 // pred_check
      _
    $region11: #{tpu_custom_call.1} parent=1 // pred_check_branch
      %39 = sbr.rel (0) target = $region13
    $region12: #{tpu_custom_call.1} parent=1 // pred_region
      _
    $region13: #{tpu_custom_call.1} parent=1 // pred_fallthru
      _
    // Predicated region
    $region14: #{tpu_custom_call.1} parent=1 // pred_check
      _
    $region15: #{tpu_custom_call.1} parent=1 // pred_check_branch
      %41 = sbr.rel (0) target = $region17
    $region16: #{tpu_custom_call.1} parent=1 // pred_region
      %s43 = ssub.s32 1024, 1024
      %44 = vsyncadd [#allocation6], %s43
      %s45 = sshll.u32 [#allocation7], 4
      %s46 = int_to_ptr.vmem [resolvable:$true] %s45
      %51 = dma.hbm_to_vmem [thread:$0]  %s3, 1024, %s46, [#allocation6], 128, 128, 8
    $region17: #{tpu_custom_call.1} parent=1 // pred_fallthru
      _
    // Predicated region
    $region18: #{tpu_custom_call.1} parent=1 // pred_check
      _
    $region19: #{tpu_custom_call.1} parent=1 // pred_check_branch
      %53 = sbr.rel (0) target = $region21
    $region20: #{tpu_custom_call.1} parent=1 // pred_region
      _
    $region21: #{tpu_custom_call.1} parent=1 // pred_fallthru
      _
    // Predicated region
    $region22: #{tpu_custom_call.1} parent=1 // pred_check
      _
    $region23: #{tpu_custom_call.1} parent=1 // pred_check_branch
      %55 = sbr.rel (0) target = $region25
    $region24: #{tpu_custom_call.1} parent=1 // pred_region
      %s57 = ssub.s32 1024, 1024
      %58 = vsyncadd [#allocation9], %s57
      %s59 = sshll.u32 [#allocation8], 4
      %s60 = int_to_ptr.vmem [resolvable:$true] %s59
      %65 = dma.hbm_to_vmem [thread:$0]  %s5, 1024, %s60, [#allocation9], 128, 128, 8
    $region25: #{tpu_custom_call.1} parent=1 // pred_fallthru
      _
    // Predicated region
    $region26: #{tpu_custom_call.1} parent=1 // pred_check
      _
    $region27: #{tpu_custom_call.1} parent=1 // pred_check_branch
      %67 = sbr.rel (0) target = $region29
    $region28: #{tpu_custom_call.1} parent=1 // pred_region
      _
    $region29: #{tpu_custom_call.1} parent=1 // pred_fallthru
      _
    // Predicated region
    $region30: #{tpu_custom_call.1} parent=1 // pred_check
      _
    $region31: #{tpu_custom_call.1} parent=1 // pred_check_branch
      %69 = sbr.rel (0) target = $region33
    $region32: #{tpu_custom_call.1} parent=1 // pred_region
      %70 = dma.done [#allocation3], 128
    $region33: #{tpu_custom_call.1} parent=1 // pred_fallthru
      _
    // Predicated region
    $region34: #{tpu_custom_call.1} parent=1 // pred_check
      _
    $region35: #{tpu_custom_call.1} parent=1 // pred_check_branch
      %72 = sbr.rel (0) target = $region37
    $region36: #{tpu_custom_call.1} parent=1 // pred_region
      %73 = dma.done [#allocation6], 256
    $region37: #{tpu_custom_call.1} parent=1 // pred_fallthru
      _
    // Predicated region
    $region38: #{tpu_custom_call.1} parent=1 // pred_check
      _
    $region39: #{tpu_custom_call.1} parent=1 // pred_check_branch
      %75 = sbr.rel (0) target = $region41
    $region40: #{tpu_custom_call.1} parent=1 // pred_region
      %76 = dma.done [#allocation6], 1024
    $region41: #{tpu_custom_call.1} parent=1 // pred_fallthru
      _
    // Predicated region
    $region42: #{tpu_custom_call.1} parent=1 // pred_check
      _
    $region43: #{tpu_custom_call.1} parent=1 // pred_check_branch
      %78 = sbr.rel (0) target = $region45
    $region44: #{tpu_custom_call.1} parent=1 // pred_region
      %79 = dma.done [#allocation9], 1024
    $region45: #{tpu_custom_call.1} parent=1 // pred_fallthru
      _
    %v80 = vld [vmem:[#allocation2] sm:$0xff]
    %v81 = vld [vmem:[#allocation5] sm:$0xff]
    %v82 = vld [vmem:[#allocation5 + $0x8] sm:$0xff]
    %v83 = vld [vmem:[%s2] sm:$0x1]
    %v85 = vlaneseq
    %v86 = vshrl.u32 %v85, 7
    %v87 = vsub.s32 0, %v86
    %v88 = vrot.slane %v83, %v87
    %vm90 = vcmask 130048
    %v92 = vsel %vm90, %v80, 0
    %94 = vmatprep.subr.mxu0 0.0
    %95 = vmatpush1.msra.mxu0 %v81
    %96 = vmatprep.subr.mxu0 0.0
    %97 = vmatpush1.msra.mxu0 %v82
    %98 = vmatprep.subr.mxu0 0.0
    %99 = vmatpush1.msra.mxu0 0.0
    %100 = vmatprep.subr.mxu0 0.0
    %101 = vmatpush1.msra.mxu0 0.0
    %102 = vmatprep.subr.mxu0 0.0
    %103 = vmatpush1.msra.mxu0 0.0
    %104 = vmatprep.subr.mxu0 0.0
    %105 = vmatpush1.msra.mxu0 0.0
    %106 = vmatprep.subr.mxu0 0.0
    %107 = vmatpush1.msra.mxu0 0.0
    %108 = vmatprep.subr.mxu0 0.0
    %109 = vmatpush1.msra.mxu0 0.0
    %110 = vmatprep.subr.mxu0 0.0
    %111 = vmatpush1.msra.mxu0 0.0
    %112 = vmatprep.subr.mxu0 0.0
    %113 = vmatpush1.msra.mxu0 0.0
    %114 = vmatprep.subr.mxu0 0.0
    %115 = vmatpush1.msra.mxu0 0.0
    %116 = vmatprep.subr.mxu0 0.0
    %117 = vmatpush1.msra.mxu0 0.0
    %118 = vmatprep.subr.mxu0 0.0
    %119 = vmatpush1.msra.mxu0 0.0
    %120 = vmatprep.subr.mxu0 0.0
    %121 = vmatpush1.msra.mxu0 0.0
    %122 = vmatprep.subr.mxu0 0.0
    %123 = vmatpush1.msra.mxu0 0.0
    %124 = vmatprep.subr.mxu0 0.0
    %125 = vmatpush1.msra.mxu0 0.0
    %126 = vmatprep.subr.mxu0 0.0
    %127 = vmatpush1.msra.mxu0 0.0
    %128 = vmatprep.subr.mxu0 0.0
    %129 = vmatpush1.msra.mxu0 0.0
    %130 = vmatprep.subr.mxu0 0.0
    %131 = vmatpush1.msra.mxu0 0.0
    %132 = vmatprep.subr.mxu0 0.0
    %133 = vmatpush1.msra.mxu0 0.0
    %134 = vmatprep.subr.mxu0 0.0
    %135 = vmatpush1.msra.mxu0 0.0
    %136 = vmatprep.subr.mxu0 0.0
    %137 = vmatpush1.msra.mxu0 0.0
    %138 = vmatprep.subr.mxu0 0.0
    %139 = vmatpush1.msra.mxu0 0.0
    %140 = vmatprep.subr.mxu0 0.0
    %141 = vmatpush1.msra.mxu0 0.0
    %142 = vmatprep.subr.mxu0 0.0
    %143 = vmatpush1.msra.mxu0 0.0
    %144 = vmatprep.subr.mxu0 0.0
    %145 = vmatpush1.msra.mxu0 0.0
    %146 = vmatprep.subr.mxu0 0.0
    %147 = vmatpush1.msra.mxu0 0.0
    %148 = vmatprep.subr.mxu0 0.0
    %149 = vmatpush1.msra.mxu0 0.0
    %150 = vmatprep.subr.mxu0 0.0
    %151 = vmatpush1.msra.mxu0 0.0
    %152 = vmatprep.subr.mxu0 0.0
    %153 = vmatpush1.msra.mxu0 0.0
    %154 = vmatprep.subr.mxu0 0.0
    %155 = vmatpush1.msra.mxu0 0.0
    %156 = vmatprep.subr.mxu0 0.0
    %157 = vmatpush1.msra.mxu0 0.0
    %158 = vmatprep.mubr.f32.mxu0 0.0
    %159 = vmatmul.mubr.f32.gmra.mrb[0].mxu0 %v92
    %v160 = vpop.f32.mrb[0].mxu0
    %v161 = vadd.f32 %v88, %v160
    %v162 = vpop.f32.mrb[0].mxu0
    %163 = vdwg.mxu0
    %v164 = vmax.f32 %v161, 0.0
    %v165 = vld [vmem:[#allocation7] sm:$0xff]
    %v166 = vld [vmem:[#allocation7 + $0x8] sm:$0xff]
    %v167 = vld [vmem:[#allocation7 + $0x10] sm:$0xff]
    %v168 = vld [vmem:[#allocation7 + $0x18] sm:$0xff]
    %v169 = vld [vmem:[#allocation7 + $0x20] sm:$0xff]
    %v170 = vld [vmem:[#allocation7 + $0x28] sm:$0xff]
    %v171 = vld [vmem:[#allocation7 + $0x30] sm:$0xff]
    %v172 = vld [vmem:[#allocation7 + $0x38] sm:$0xff]
    %v173 = vld [vmem:[%s4] sm:$0x1]
    %v175 = vlaneseq
    %v176 = vshrl.u32 %v175, 7
    %v177 = vsub.s32 0, %v176
    %v178 = vrot.slane %v173, %v177
    %vm180 = vcmask 523264
    %v182 = vsel %vm180, %v164, 0
    %184 = vmatprep.subr.mxu0 0.0
    %185 = vmatpush1.msra.mxu0 %v165
    %186 = vmatprep.subr.mxu0 0.0
    %187 = vmatpush1.msra.mxu0 %v166
    %188 = vmatprep.subr.mxu0 0.0
    %189 = vmatpush1.msra.mxu0 %v167
    %190 = vmatprep.subr.mxu0 0.0
    %191 = vmatpush1.msra.mxu0 %v168
    %192 = vmatprep.subr.mxu0 0.0
    %193 = vmatpush1.msra.mxu0 %v169
    %194 = vmatprep.subr.mxu0 0.0
    %195 = vmatpush1.msra.mxu0 %v170
    %196 = vmatprep.subr.mxu0 0.0
    %197 = vmatpush1.msra.mxu0 %v171
    %198 = vmatprep.subr.mxu0 0.0
    %199 = vmatpush1.msra.mxu0 %v172
    %200 = vmatprep.subr.mxu0 0.0
    %201 = vmatpush1.msra.mxu0 0.0
    %202 = vmatprep.subr.mxu0 0.0
    %203 = vmatpush1.msra.mxu0 0.0
    %204 = vmatprep.subr.mxu0 0.0
    %205 = vmatpush1.msra.mxu0 0.0
    %206 = vmatprep.subr.mxu0 0.0
    %207 = vmatpush1.msra.mxu0 0.0
    %208 = vmatprep.subr.mxu0 0.0
    %209 = vmatpush1.msra.mxu0 0.0
    %210 = vmatprep.subr.mxu0 0.0
    %211 = vmatpush1.msra.mxu0 0.0
    %212 = vmatprep.subr.mxu0 0.0
    %213 = vmatpush1.msra.mxu0 0.0
    %214 = vmatprep.subr.mxu0 0.0
    %215 = vmatpush1.msra.mxu0 0.0
    %216 = vmatprep.subr.mxu0 0.0
    %217 = vmatpush1.msra.mxu0 0.0
    %218 = vmatprep.subr.mxu0 0.0
    %219 = vmatpush1.msra.mxu0 0.0
    %220 = vmatprep.subr.mxu0 0.0
    %221 = vmatpush1.msra.mxu0 0.0
    %222 = vmatprep.subr.mxu0 0.0
    %223 = vmatpush1.msra.mxu0 0.0
    %224 = vmatprep.subr.mxu0 0.0
    %225 = vmatpush1.msra.mxu0 0.0
    %226 = vmatprep.subr.mxu0 0.0
    %227 = vmatpush1.msra.mxu0 0.0
    %228 = vmatprep.subr.mxu0 0.0
    %229 = vmatpush1.msra.mxu0 0.0
    %230 = vmatprep.subr.mxu0 0.0
    %231 = vmatpush1.msra.mxu0 0.0
    %232 = vmatprep.subr.mxu0 0.0
    %233 = vmatpush1.msra.mxu0 0.0
    %234 = vmatprep.subr.mxu0 0.0
    %235 = vmatpush1.msra.mxu0 0.0
    %236 = vmatprep.subr.mxu0 0.0
    %237 = vmatpush1.msra.mxu0 0.0
    %238 = vmatprep.subr.mxu0 0.0
    %239 = vmatpush1.msra.mxu0 0.0
    %240 = vmatprep.subr.mxu0 0.0
    %241 = vmatpush1.msra.mxu0 0.0
    %242 = vmatprep.subr.mxu0 0.0
    %243 = vmatpush1.msra.mxu0 0.0
    %244 = vmatprep.subr.mxu0 0.0
    %245 = vmatpush1.msra.mxu0 0.0
    %246 = vmatprep.subr.mxu0 0.0
    %247 = vmatpush1.msra.mxu0 0.0
    %248 = vmatprep.mubr.f32.mxu0 0.0
    %249 = vmatmul.mubr.f32.gmra.mrb[0].mxu0 %v182
    %v250 = vpop.f32.mrb[0].mxu0
    %v251 = vadd.f32 %v178, %v250
    %v252 = vpop.f32.mrb[0].mxu0
    %253 = vdwg.mxu0
    %v254 = vmax.f32 %v251, 0.0
    %v255 = vld [vmem:[#allocation8] sm:$0xff]
    %v256 = vld [vmem:[#allocation8 + $0x8] sm:$0xff]
    %v257 = vld [vmem:[#allocation8 + $0x10] sm:$0xff]
    %v258 = vld [vmem:[#allocation8 + $0x18] sm:$0xff]
    %v259 = vld [vmem:[#allocation8 + $0x20] sm:$0xff]
    %v260 = vld [vmem:[#allocation8 + $0x28] sm:$0xff]
    %v261 = vld [vmem:[#allocation8 + $0x30] sm:$0xff]
    %v262 = vld [vmem:[#allocation8 + $0x38] sm:$0xff]
    %v263 = vld [vmem:[%s6] sm:$0x1]
    %v265 = vlaneseq
    %v266 = vshrl.u32 %v265, 7
    %v267 = vsub.s32 0, %v266
    %v268 = vrot.slane %v263, %v267
    %v271 = vsel %vm180, %v254, 0
    %273 = vmatprep.subr.mxu0 0.0
    %274 = vmatpush1.msra.mxu0 %v255
    %275 = vmatprep.subr.mxu0 0.0
    %276 = vmatpush1.msra.mxu0 %v256
    %277 = vmatprep.subr.mxu0 0.0
    %278 = vmatpush1.msra.mxu0 %v257
    %279 = vmatprep.subr.mxu0 0.0
    %280 = vmatpush1.msra.mxu0 %v258
    %281 = vmatprep.subr.mxu0 0.0
    %282 = vmatpush1.msra.mxu0 %v259
    %283 = vmatprep.subr.mxu0 0.0
    %284 = vmatpush1.msra.mxu0 %v260
    %285 = vmatprep.subr.mxu0 0.0
    %286 = vmatpush1.msra.mxu0 %v261
    %287 = vmatprep.subr.mxu0 0.0
    %288 = vmatpush1.msra.mxu0 %v262
    %289 = vmatprep.subr.mxu0 0.0
    %290 = vmatpush1.msra.mxu0 0.0
    %291 = vmatprep.subr.mxu0 0.0
    %292 = vmatpush1.msra.mxu0 0.0
    %293 = vmatprep.subr.mxu0 0.0
    %294 = vmatpush1.msra.mxu0 0.0
    %295 = vmatprep.subr.mxu0 0.0
    %296 = vmatpush1.msra.mxu0 0.0
    %297 = vmatprep.subr.mxu0 0.0
    %298 = vmatpush1.msra.mxu0 0.0
    %299 = vmatprep.subr.mxu0 0.0
    %300 = vmatpush1.msra.mxu0 0.0
    %301 = vmatprep.subr.mxu0 0.0
    %302 = vmatpush1.msra.mxu0 0.0
    %303 = vmatprep.subr.mxu0 0.0
    %304 = vmatpush1.msra.mxu0 0.0
    %305 = vmatprep.subr.mxu0 0.0
    %306 = vmatpush1.msra.mxu0 0.0
    %307 = vmatprep.subr.mxu0 0.0
    %308 = vmatpush1.msra.mxu0 0.0
    %309 = vmatprep.subr.mxu0 0.0
    %310 = vmatpush1.msra.mxu0 0.0
    %311 = vmatprep.subr.mxu0 0.0
    %312 = vmatpush1.msra.mxu0 0.0
    %313 = vmatprep.subr.mxu0 0.0
    %314 = vmatpush1.msra.mxu0 0.0
    %315 = vmatprep.subr.mxu0 0.0
    %316 = vmatpush1.msra.mxu0 0.0
    %317 = vmatprep.subr.mxu0 0.0
    %318 = vmatpush1.msra.mxu0 0.0
    %319 = vmatprep.subr.mxu0 0.0
    %320 = vmatpush1.msra.mxu0 0.0
    %321 = vmatprep.subr.mxu0 0.0
    %322 = vmatpush1.msra.mxu0 0.0
    %323 = vmatprep.subr.mxu0 0.0
    %324 = vmatpush1.msra.mxu0 0.0
    %325 = vmatprep.subr.mxu0 0.0
    %326 = vmatpush1.msra.mxu0 0.0
    %327 = vmatprep.subr.mxu0 0.0
    %328 = vmatpush1.msra.mxu0 0.0
    %329 = vmatprep.subr.mxu0 0.0
    %330 = vmatpush1.msra.mxu0 0.0
    %331 = vmatprep.subr.mxu0 0.0
    %332 = vmatpush1.msra.mxu0 0.0
    %333 = vmatprep.subr.mxu0 0.0
    %334 = vmatpush1.msra.mxu0 0.0
    %335 = vmatprep.subr.mxu0 0.0
    %336 = vmatpush1.msra.mxu0 0.0
    %337 = vmatprep.mubr.f32.mxu0 0.0
    %338 = vmatmul.mubr.f32.gmra.mrb[0].mxu0 %v271
    %v339 = vpop.f32.mrb[0].mxu0
    %v340 = vadd.f32 %v268, %v339
    %v341 = vpop.f32.mrb[0].mxu0
    %342 = vdwg.mxu0
    %v343 = vlaneseq
    %v344 = vand.u32 %v343, 127
    %345 = vrot.lane.b32.xlu0 %v340, 127
    %v346 = vpop.permute.xlu0 %345
    %347 = vrot.lane.b32.xlu0 %v340, 1
    %v348 = vpop.permute.xlu0 %347
    %v349 = vand.u32 %v344, 1
    %vm350 = vcmp.eq.s32.totalorder %v349, 0
    %v351 = vsel %vm350, %v346, %v348
    %v352 = vmax.f32 %v340, %v351
    %353 = vrot.lane.b32.xlu0 %v352, 126
    %v354 = vpop.permute.xlu0 %353
    %355 = vrot.lane.b32.xlu0 %v352, 2
    %v356 = vpop.permute.xlu0 %355
    %v357 = vand.u32 %v344, 2
    %vm358 = vcmp.eq.s32.totalorder %v357, 0
    %v359 = vsel %vm358, %v354, %v356
    %v360 = vmax.f32 %v352, %v359
    %361 = vrot.lane.b32.xlu0 %v360, 124
    %v362 = vpop.permute.xlu0 %361
    %363 = vrot.lane.b32.xlu0 %v360, 4
    %v364 = vpop.permute.xlu0 %363
    %v365 = vand.u32 %v344, 4
    %vm366 = vcmp.eq.s32.totalorder %v365, 0
    %v367 = vsel %vm366, %v362, %v364
    %v368 = vmax.f32 %v360, %v367
    %369 = vrot.lane.b32.xlu0 %v368, 120
    %v370 = vpop.permute.xlu0 %369
    %371 = vrot.lane.b32.xlu0 %v368, 8
    %v372 = vpop.permute.xlu0 %371
    %v373 = vand.u32 %v344, 8
    %vm374 = vcmp.eq.s32.totalorder %v373, 0
    %v375 = vsel %vm374, %v370, %v372
    %v376 = vmax.f32 %v368, %v375
    %377 = vrot.lane.b32.xlu0 %v376, 112
    %v378 = vpop.permute.xlu0 %377
    %379 = vrot.lane.b32.xlu0 %v376, 16
    %v380 = vpop.permute.xlu0 %379
    %v381 = vand.u32 %v344, 16
    %vm382 = vcmp.eq.s32.totalorder %v381, 0
    %v383 = vsel %vm382, %v378, %v380
    %v384 = vmax.f32 %v376, %v383
    %v385 = vsub.f32 %v340, %v384
    %v386 = vmul.f32 %v385, 1.442695
    %v387 = vpow.pop %v386
    %388 = vrot.lane.b32.xlu0 %v387, 127
    %v389 = vpop.permute.xlu0 %388
    %390 = vrot.lane.b32.xlu0 %v387, 1
    %v391 = vpop.permute.xlu0 %390
    %v392 = vsel %vm350, %v389, %v391
    %v393 = vadd.f32 %v387, %v392
    %394 = vrot.lane.b32.xlu0 %v393, 126
    %v395 = vpop.permute.xlu0 %394
    %396 = vrot.lane.b32.xlu0 %v393, 2
    %v397 = vpop.permute.xlu0 %396
    %v398 = vsel %vm358, %v395, %v397
    %v399 = vadd.f32 %v393, %v398
    %400 = vrot.lane.b32.xlu0 %v399, 124
    %v401 = vpop.permute.xlu0 %400
    %402 = vrot.lane.b32.xlu0 %v399, 4
    %v403 = vpop.permute.xlu0 %402
    %v404 = vsel %vm366, %v401, %v403
    %v405 = vadd.f32 %v399, %v404
    %406 = vrot.lane.b32.xlu0 %v405, 120
    %v407 = vpop.permute.xlu0 %406
    %408 = vrot.lane.b32.xlu0 %v405, 8
    %v409 = vpop.permute.xlu0 %408
    %v410 = vsel %vm374, %v407, %v409
    %v411 = vadd.f32 %v405, %v410
    %412 = vrot.lane.b32.xlu0 %v411, 112
    %v413 = vpop.permute.xlu0 %412
    %414 = vrot.lane.b32.xlu0 %v411, 16
    %v415 = vpop.permute.xlu0 %414
    %v416 = vsel %vm382, %v413, %v415
    %v417 = vadd.f32 %v411, %v416
    %v418 = vmax.f32 %v417, 1.1754944e-38
    %v419 = vrcp.pop %v418
    %v420 = vmul.f32 %v418, %v419
    %v421 = vsub.f32 2.0, %v420
    %v422 = vmul.f32 %v419, %v421
    %v423 = vmul.f32 %v387, %v422
    %424 = vst [vmem:[#allocation10] sm:$0xff] %v423
    // Predicated region
    $region46: #{tpu_custom_call.1} parent=1 // pred_check
      _
    $region47: #{tpu_custom_call.1} parent=1 // pred_check_branch
      %426 = sbr.rel (0) target = $region49
    $region48: #{tpu_custom_call.1} parent=1 // pred_region
      %s428 = ssub.s32 128, 128
      %429 = vsyncadd [#allocation4], %s428
      %s431 = sshll.u32 [#allocation10], 4
      %s432 = int_to_ptr.vmem [resolvable:$true] %s431
      %434 = dma.vmem_to_hbm [thread:$0]  %s432, 128, %s7, [#allocation4]
    $region49: #{tpu_custom_call.1} parent=1 // pred_fallthru
      _
    // Predicated region
    $region50: #{tpu_custom_call.1} parent=1 // pred_check
      _
    $region51: #{tpu_custom_call.1} parent=1 // pred_check_branch
      %436 = sbr.rel (0) target = $region53
    $region52: #{tpu_custom_call.1} parent=1 // pred_region
      %437 = dma.done [#allocation4], 128
    $region53: #{tpu_custom_call.1} parent=1 // pred_fallthru
      _
    %438 = vsyncpa [#allocation3], 1
    %439 = vsyncpa [#allocation6], 1
    %440 = vsyncpa [#allocation9], 1
    %441 = vsyncpa [#allocation4], 1

</llo_original>
